<compile_context>
chip_gen: v5e
topology: v5e:2x2
jax: 0.10.0
libtpu: 0.0.40
codegen_flags: <defaults>
</compile_context>

<pallas_src>
import jax
import jax.numpy as jnp
from jax.experimental import pallas as pl
from jax.experimental.pallas import tpu as pltpu


LANE = 128  # TPU lane width; output layer is padded to this many columns.


def qnetwork_kernel(x_ref, w1_ref, b1_ref, w2_ref, b2_ref, w3_ref, b3_ref, o_ref):
    # In-kernel cast of the activations (free VPU filler under the MXU); the
    # wrapper keeps x in f32 in HBM so there is no extra XLA pass over it.
    x = x_ref[...].astype(jnp.bfloat16)

    # Layer 1: (TILE_B, S)bf16 @ (S, 128)bf16 -> f32 acc, bias + ReLU in f32.
    h1 = jnp.dot(x, w1_ref[...], preferred_element_type=jnp.float32)
    h1 = jnp.maximum(h1 + b1_ref[...], 0.0).astype(jnp.bfloat16)

    # Layer 2: (TILE_B, 128)bf16 @ (128, 128)bf16 -> f32 acc, bias + ReLU in f32.
    h2 = jnp.dot(h1, w2_ref[...], preferred_element_type=jnp.float32)
    h2 = jnp.maximum(h2 + b2_ref[...], 0.0).astype(jnp.bfloat16)

    # Output layer: (TILE_B, 128)bf16 @ (128, 128)bf16 -> f32 lane-dense store.
    out = jnp.dot(h2, w3_ref[...], preferred_element_type=jnp.float32)
    o_ref[...] = (out + b3_ref[...]).astype(o_ref.dtype)


def _round_up(n, m):
    return ((n + m - 1) // m) * m


def _num_tensorcores():
    """Best-effort TC-per-chip detection (v7x has 2; v5e/v6e have 1)."""
    try:
        kind = jax.devices()[0].device_kind.lower()
        if "v7" in kind or "7x" in kind:
            return 2
    except Exception:
        pass
    return 1


def qnetwork_forward(x, params, *, max_tile_b=4096):
    """x: (B, state_dim) float32. params from init_params (bf16 weights, padded out layer).

    Returns (B, action_dim) float32 Q-values.
    """
    w1, b1, w2, b2, w3, b3 = (params[k] for k in ("w1", "b1", "w2", "b2", "w3", "b3"))
    A = int(params["action_dim"])

    B, S = x.shape
    N = w3.shape[1]  # padded output width (LANE)

    # Tile choice: grid steps are pure serial overhead on single-TC chips, so
    # default to one step covering the whole batch. On v7x, split into 2
    # balanced tiles so the "parallel" batch axis shards across both cores.
    num_tc = _num_tensorcores()
    n_tiles = num_tc if (num_tc > 1 and B >= 32) else 1
    tile_b = _round_up(pl.cdiv(B, n_tiles), 16)      # 16-row alignment for bf16 packing
    tile_b = min(tile_b, _round_up(max_tile_b, 16))  # VMEM safety cap (all generations)

    b_pad = _round_up(B, tile_b)
    if b_pad != B:
        x = jnp.pad(x, ((0, b_pad - B), (0, 0)))  # the only wrapper-side pass over x

    grid = (b_pad // tile_b,)

    def resident(arr):
        # Weights/biases: same block every step -> stay VMEM-resident.
        return pl.BlockSpec(arr.shape, lambda i: (0,) * arr.ndim)

    out = pl.pallas_call(
        qnetwork_kernel,
        out_shape=jax.ShapeDtypeStruct((b_pad, N), jnp.float32),
        grid=grid,
        in_specs=[
            pl.BlockSpec((tile_b, S), lambda i: (i, 0)),  # activations stream over B
            resident(w1), resident(b1),
            resident(w2), resident(b2),
            resident(w3), resident(b3),
        ],
        out_specs=pl.BlockSpec((tile_b, N), lambda i: (i, 0)),
        compiler_params=pltpu.CompilerParams(
            dimension_semantics=("parallel",),  # v7x: shard batch tiles across both TCs
        ),
    )(x, w1, b1, w2, b2, w3, b3)

    return out[:B, :A]


def init_params(key, state_dim, action_dim, hidden=128):
    """PyTorch-style uniform(-1/sqrt(fan_in), 1/sqrt(fan_in)) init.

    Weights are stored as (in_features, out_features) (transposed vs.
    torch.nn.Linear.weight) in bfloat16; biases stay float32 with shape
    (1, out_features). The output layer is zero-padded to LANE columns so the
    kernel's final store is lane-dense; the wrapper slices back to action_dim.
    """
    keys = jax.random.split(key, 6)

    def lin(kw, kb, fan_in, fan_out):
        bound = 1.0 / jnp.sqrt(jnp.float32(fan_in))
        w = jax.random.uniform(kw, (fan_in, fan_out), jnp.float32, -bound, bound)
        b = jax.random.uniform(kb, (1, fan_out), jnp.float32, -bound, bound)
        return w, b

    w1, b1 = lin(keys[0], keys[1], state_dim, hidden)
    w2, b2 = lin(keys[2], keys[3], hidden, hidden)
    w3, b3 = lin(keys[4], keys[5], hidden, action_dim)

    # Pad the output layer to the lane width with zero columns.
    w3p = jnp.zeros((hidden, LANE), jnp.float32).at[:, :action_dim].set(w3)
    b3p = jnp.zeros((1, LANE), jnp.float32).at[:, :action_dim].set(b3)

    return {
        "w1": w1.astype(jnp.bfloat16), "b1": b1,
        "w2": w2.astype(jnp.bfloat16), "b2": b2,
        "w3": w3p.astype(jnp.bfloat16), "b3": b3p,
        "action_dim": action_dim,
    }


def reference_forward(x, p):
    """Pure-JAX reference matching the kernel's numerics (bf16 operands, f32 accum).

    Matmul precision pinned to HIGHEST so TPU's default bf16-reduced matmul
    cannot weaken the check.
    """
    A = int(p["action_dim"])
    hp = jax.lax.Precision.HIGHEST
    q = lambda a: a.astype(jnp.bfloat16).astype(jnp.float32)
    w1, w2, w3 = q(p["w1"]), q(p["w2"]), q(p["w3"])
    h1 = jnp.maximum(jnp.dot(q(x), w1, precision=hp) + p["b1"], 0.0)
    h2 = jnp.maximum(jnp.dot(q(h1), w2, precision=hp) + p["b2"], 0.0)
    out = jnp.dot(q(h2), w3, precision=hp) + p["b3"]
    return out[:, :A]


if __name__ == "__main__":
    # BipedalWalker-v3: state_dim=24, action_dim=4.
    B, STATE_DIM, ACTION_DIM = 512, 24, 4

    key = jax.random.PRNGKey(0)
    k_params, k_x = jax.random.split(key)
    params = init_params(k_params, STATE_DIM, ACTION_DIM)
    x = jax.random.normal(k_x, (B, STATE_DIM), jnp.float32)

    q_vals = qnetwork_forward(x, params)
    q_vals = jax.block_until_ready(q_vals)

    # Sanity check against a pure-JAX reference with matching bf16 quantization.
    ref = jax.block_until_ready(reference_forward(x, params))
    assert q_vals.shape == (B, ACTION_DIM)
    assert jnp.allclose(q_vals, ref, atol=1e-3, rtol=1e-3)

    print("KERNEL_OK")
</pallas_src>

<mosaic_0001>
module attributes {stable_mosaic.version = 11 : i64} {
  func.func @qnetwork_kernel(%arg0: i32, %arg1: memref<512x24xf32, #tpu.memory_space<vmem>>, %arg2: memref<24x128xbf16, #tpu.memory_space<vmem>>, %arg3: memref<1x128xf32, #tpu.memory_space<vmem>>, %arg4: memref<128x128xbf16, #tpu.memory_space<vmem>>, %arg5: memref<1x128xf32, #tpu.memory_space<vmem>>, %arg6: memref<128x128xbf16, #tpu.memory_space<vmem>>, %arg7: memref<1x128xf32, #tpu.memory_space<vmem>>, %arg8: memref<512x128xf32, #tpu.memory_space<vmem>>) attributes {dimension_semantics = [#tpu.dimension_semantics<parallel>], iteration_bounds = array<i64: 1>, scalar_prefetch = 0 : i64, scratch_operands = 0 : i64, tpu.core_type = #tpu.core_type<tc>, window_params = [{transform_indices = @transform_0, window_bounds = array<i64: 512, 24>}, {pipeline_mode = #tpu.pipeline_mode<synchronous>, transform_indices = @transform_1, window_bounds = array<i64: 24, 128>}, {pipeline_mode = #tpu.pipeline_mode<synchronous>, transform_indices = @transform_2, window_bounds = array<i64: 1, 128>}, {pipeline_mode = #tpu.pipeline_mode<synchronous>, transform_indices = @transform_3, window_bounds = array<i64: 128, 128>}, {pipeline_mode = #tpu.pipeline_mode<synchronous>, transform_indices = @transform_4, window_bounds = array<i64: 1, 128>}, {pipeline_mode = #tpu.pipeline_mode<synchronous>, transform_indices = @transform_5, window_bounds = array<i64: 128, 128>}, {pipeline_mode = #tpu.pipeline_mode<synchronous>, transform_indices = @transform_6, window_bounds = array<i64: 1, 128>}, {transform_indices = @transform_7, window_bounds = array<i64: 512, 128>}]} {
    %c0 = arith.constant 0 : index
    %c0_0 = arith.constant 0 : index
    %0 = vector.load %arg1[%c0, %c0_0] : memref<512x24xf32, #tpu.memory_space<vmem>>, vector<512x24xf32>
    %1 = arith.truncf %0 : vector<512x24xf32> to vector<512x24xbf16>
    %c0_1 = arith.constant 0 : index
    %c0_2 = arith.constant 0 : index
    %2 = vector.load %arg2[%c0_1, %c0_2] : memref<24x128xbf16, #tpu.memory_space<vmem>>, vector<24x128xbf16>
    %cst = arith.constant dense<0.000000e+00> : vector<512x128xf32>
    %3 = tpu.matmul %1, %2, %cst {dimension_numbers = #tpu.dot_dimension_numbers<[1], [0], [0], [1], [0, 0, 1, 1], [], []>} : vector<512x24xbf16>, vector<24x128xbf16>, vector<512x128xf32> -> vector<512x128xf32>
    %c0_3 = arith.constant 0 : index
    %c0_4 = arith.constant 0 : index
    %4 = vector.load %arg3[%c0_3, %c0_4] : memref<1x128xf32, #tpu.memory_space<vmem>>, vector<1x128xf32>
    %5 = vector.broadcast %4 : vector<1x128xf32> to vector<512x128xf32>
    %6 = arith.addf %3, %5 : vector<512x128xf32>
    %cst_5 = arith.constant 0.000000e+00 : f32
    %7 = vector.broadcast %cst_5 : f32 to vector<512x128xf32>
    %8 = arith.maximumf %6, %7 : vector<512x128xf32>
    %9 = arith.truncf %8 : vector<512x128xf32> to vector<512x128xbf16>
    %c0_6 = arith.constant 0 : index
    %c0_7 = arith.constant 0 : index
    %10 = vector.load %arg4[%c0_6, %c0_7] : memref<128x128xbf16, #tpu.memory_space<vmem>>, vector<128x128xbf16>
    %cst_8 = arith.constant dense<0.000000e+00> : vector<512x128xf32>
    %11 = tpu.matmul %9, %10, %cst_8 {dimension_numbers = #tpu.dot_dimension_numbers<[1], [0], [0], [1], [0, 0, 1, 1], [], []>} : vector<512x128xbf16>, vector<128x128xbf16>, vector<512x128xf32> -> vector<512x128xf32>
    %c0_9 = arith.constant 0 : index
    %c0_10 = arith.constant 0 : index
    %12 = vector.load %arg5[%c0_9, %c0_10] : memref<1x128xf32, #tpu.memory_space<vmem>>, vector<1x128xf32>
    %13 = vector.broadcast %12 : vector<1x128xf32> to vector<512x128xf32>
    %14 = arith.addf %11, %13 : vector<512x128xf32>
    %cst_11 = arith.constant 0.000000e+00 : f32
    %15 = vector.broadcast %cst_11 : f32 to vector<512x128xf32>
    %16 = arith.maximumf %14, %15 : vector<512x128xf32>
    %17 = arith.truncf %16 : vector<512x128xf32> to vector<512x128xbf16>
    %c0_12 = arith.constant 0 : index
    %c0_13 = arith.constant 0 : index
    %18 = vector.load %arg6[%c0_12, %c0_13] : memref<128x128xbf16, #tpu.memory_space<vmem>>, vector<128x128xbf16>
    %cst_14 = arith.constant dense<0.000000e+00> : vector<512x128xf32>
    %19 = tpu.matmul %17, %18, %cst_14 {dimension_numbers = #tpu.dot_dimension_numbers<[1], [0], [0], [1], [0, 0, 1, 1], [], []>} : vector<512x128xbf16>, vector<128x128xbf16>, vector<512x128xf32> -> vector<512x128xf32>
    %c0_15 = arith.constant 0 : index
    %c0_16 = arith.constant 0 : index
    %20 = vector.load %arg7[%c0_15, %c0_16] : memref<1x128xf32, #tpu.memory_space<vmem>>, vector<1x128xf32>
    %21 = vector.broadcast %20 : vector<1x128xf32> to vector<512x128xf32>
    %22 = arith.addf %19, %21 : vector<512x128xf32>
    %c0_17 = arith.constant 0 : index
    %c0_18 = arith.constant 0 : index
    %23 = vector.load %arg8[%c0_17, %c0_18] : memref<512x128xf32, #tpu.memory_space<vmem>>, vector<512x128xf32>
    tpu.vector_store %arg8[%c0_17, %c0_18], %22 {strides = array<i32>} : memref<512x128xf32, #tpu.memory_space<vmem>>, vector<512x128xf32>,
    return
  }
  func.func @transform_0(%arg0: i32) -> (i32, i32) {
    %c0_i32 = arith.constant 0 : i32
    %c0_i32_0 = arith.constant 0 : i32
    return %arg0, %c0_i32 : i32, i32
  }
  func.func @transform_1(%arg0: i32) -> (i32, i32) {
    %c0_i32 = arith.constant 0 : i32
    %c0_i32_0 = arith.constant 0 : i32
    %c0_i32_1 = arith.constant 0 : i32
    return %c0_i32, %c0_i32_0 : i32, i32
  }
  func.func @transform_2(%arg0: i32) -> (i32, i32) {
    %c0_i32 = arith.constant 0 : i32
    %c0_i32_0 = arith.constant 0 : i32
    %c0_i32_1 = arith.constant 0 : i32
    return %c0_i32, %c0_i32_0 : i32, i32
  }
  func.func @transform_3(%arg0: i32) -> (i32, i32) {
    %c0_i32 = arith.constant 0 : i32
    %c0_i32_0 = arith.constant 0 : i32
    %c0_i32_1 = arith.constant 0 : i32
    return %c0_i32, %c0_i32_0 : i32, i32
  }
  func.func @transform_4(%arg0: i32) -> (i32, i32) {
    %c0_i32 = arith.constant 0 : i32
    %c0_i32_0 = arith.constant 0 : i32
    %c0_i32_1 = arith.constant 0 : i32
    return %c0_i32, %c0_i32_0 : i32, i32
  }
  func.func @transform_5(%arg0: i32) -> (i32, i32) {
    %c0_i32 = arith.constant 0 : i32
    %c0_i32_0 = arith.constant 0 : i32
    %c0_i32_1 = arith.constant 0 : i32
    return %c0_i32, %c0_i32_0 : i32, i32
  }
  func.func @transform_6(%arg0: i32) -> (i32, i32) {
    %c0_i32 = arith.constant 0 : i32
    %c0_i32_0 = arith.constant 0 : i32
    %c0_i32_1 = arith.constant 0 : i32
    return %c0_i32, %c0_i32_0 : i32, i32
  }
  func.func @transform_7(%arg0: i32) -> (i32, i32) {
    %c0_i32 = arith.constant 0 : i32
    %c0_i32_0 = arith.constant 0 : i32
    return %arg0, %c0_i32 : i32, i32
  }
}

</mosaic_0001>

<llo_original>
// kernel: tpu_custom_call.1
$region0: #{tpu_custom_call.1}
  #allocation0 [shape = 'u32[]', space=smem, size = 0x4, offset = 0x4, fixed_abs, tag = 'smem constant byte address 0x4 - core index']
  #allocation1 [shape = 'u32[72,128]{1,0:T(1,128)}', space=vmem, size = 0x9000, scoped, tag = 'internal scratch']
  %s0 = inlined_call_operand.vmem [shape: f32[512,24], index: 0, kind: input, shape index: {}]
  %s1 = inlined_call_operand.vmem [shape: bf16[24,128], index: 1, kind: input, shape index: {}]
  %s2 = inlined_call_operand.vmem [shape: f32[1,128], index: 2, kind: input, shape index: {}]
  %s3 = inlined_call_operand.vmem [shape: bf16[128,128], index: 3, kind: input, shape index: {}]
  %s4 = inlined_call_operand.vmem [shape: f32[1,128], index: 4, kind: input, shape index: {}]
  %s5 = inlined_call_operand.vmem [shape: bf16[128,128], index: 5, kind: input, shape index: {}]
  %s6 = inlined_call_operand.vmem [shape: f32[1,128], index: 6, kind: input, shape index: {}]
  %s7 = inlined_call_operand.hbm [shape: f32[512,128], index: 7, kind: output, shape index: {}]
  %s8 = sld [smem:[#allocation0]]
  $region38: #{tpu_custom_call.1} parent=0
    _
  %s10 = ssub.s32 1, %s8
  %s11 = scalar_select 0, %s10, %s8
  $region1: #{tpu_custom_call.1} parent=0
    #allocation2 [shape = 'u8[262144]{0}', space=vmem, size = 0x40000, scoped, tag = 'output window, operand 0, single buffered']
    #allocation3 [shape = 's32[1]{0}', space=sflag, size = 0x4, scoped, tag = 'scoped memory for tpu_custom_call.1']
    %12 = vsyncpa [#allocation3], 0
    // Predicated region
    $region2: #{tpu_custom_call.1} parent=1 // pred_check
      _
    $region3: #{tpu_custom_call.1} parent=1 // pred_check_branch
      %14 = sbr.rel (0) target = $region5
    $region4: #{tpu_custom_call.1} parent=1 // pred_region
      _
    $region5: #{tpu_custom_call.1} parent=1 // pred_fallthru
      _
    // Predicated region
    $region6: #{tpu_custom_call.1} parent=1 // pred_check
      _
    $region7: #{tpu_custom_call.1} parent=1 // pred_check_branch
      %16 = sbr.rel (0) target = $region9
    $region8: #{tpu_custom_call.1} parent=1 // pred_region
      _
    $region9: #{tpu_custom_call.1} parent=1 // pred_fallthru
      _
    // Predicated region
    $region10: #{tpu_custom_call.1} parent=1 // pred_check
      _
    $region11: #{tpu_custom_call.1} parent=1 // pred_check_branch
      %18 = sbr.rel (0) target = $region13
    $region12: #{tpu_custom_call.1} parent=1 // pred_region
      _
    $region13: #{tpu_custom_call.1} parent=1 // pred_fallthru
      _
    // Predicated region
    $region14: #{tpu_custom_call.1} parent=1 // pred_check
      _
    $region15: #{tpu_custom_call.1} parent=1 // pred_check_branch
      %20 = sbr.rel (0) target = $region17
    $region16: #{tpu_custom_call.1} parent=1 // pred_region
      _
    $region17: #{tpu_custom_call.1} parent=1 // pred_fallthru
      _
    // Predicated region
    $region18: #{tpu_custom_call.1} parent=1 // pred_check
      _
    $region19: #{tpu_custom_call.1} parent=1 // pred_check_branch
      %22 = sbr.rel (0) target = $region21
    $region20: #{tpu_custom_call.1} parent=1 // pred_region
      _
    $region21: #{tpu_custom_call.1} parent=1 // pred_fallthru
      _
    // Predicated region
    $region22: #{tpu_custom_call.1} parent=1 // pred_check
      _
    $region23: #{tpu_custom_call.1} parent=1 // pred_check_branch
      %24 = sbr.rel (0) target = $region25
    $region24: #{tpu_custom_call.1} parent=1 // pred_region
      _
    $region25: #{tpu_custom_call.1} parent=1 // pred_fallthru
      _
    // Predicated region
    $region26: #{tpu_custom_call.1} parent=1 // pred_check
      _
    $region27: #{tpu_custom_call.1} parent=1 // pred_check_branch
      %26 = sbr.rel (0) target = $region29
    $region28: #{tpu_custom_call.1} parent=1 // pred_region
      _
    $region29: #{tpu_custom_call.1} parent=1 // pred_fallthru
      _
    %v28 = vld [vmem:[%s0] sm:$0xff]
    %v29 = vld [vmem:[%s0 + $0x8] sm:$0xff]
    %v30 = vld [vmem:[%s0 + $0x10] sm:$0xff]
    %v31 = vld [vmem:[%s0 + $0x18] sm:$0xff]
    %v32 = vld [vmem:[%s0 + $0x20] sm:$0xff]
    %v33 = vld [vmem:[%s0 + $0x28] sm:$0xff]
    %v34 = vld [vmem:[%s0 + $0x30] sm:$0xff]
    %v35 = vld [vmem:[%s0 + $0x38] sm:$0xff]
    %v36 = vld [vmem:[%s0 + $0x40] sm:$0xff]
    %v37 = vld [vmem:[%s0 + $0x48] sm:$0xff]
    %v38 = vld [vmem:[%s0 + $0x50] sm:$0xff]
    %v39 = vld [vmem:[%s0 + $0x58] sm:$0xff]
    %v40 = vld [vmem:[%s0 + $0x60] sm:$0xff]
    %v41 = vld [vmem:[%s0 + $0x68] sm:$0xff]
    %v42 = vld [vmem:[%s0 + $0x70] sm:$0xff]
    %v43 = vld [vmem:[%s0 + $0x78] sm:$0xff]
    %v44 = vld [vmem:[%s0 + $0x80] sm:$0xff]
    %v45 = vld [vmem:[%s0 + $0x88] sm:$0xff]
    %v46 = vld [vmem:[%s0 + $0x90] sm:$0xff]
    %v47 = vld [vmem:[%s0 + $0x98] sm:$0xff]
    %v48 = vld [vmem:[%s0 + $0xa0] sm:$0xff]
    %v49 = vld [vmem:[%s0 + $0xa8] sm:$0xff]
    %v50 = vld [vmem:[%s0 + $0xb0] sm:$0xff]
    %v51 = vld [vmem:[%s0 + $0xb8] sm:$0xff]
    %v52 = vld [vmem:[%s0 + $0xc0] sm:$0xff]
    %v53 = vld [vmem:[%s0 + $0xc8] sm:$0xff]
    %v54 = vld [vmem:[%s0 + $0xd0] sm:$0xff]
    %v55 = vld [vmem:[%s0 + $0xd8] sm:$0xff]
    %v56 = vld [vmem:[%s0 + $0xe0] sm:$0xff]
    %v57 = vld [vmem:[%s0 + $0xe8] sm:$0xff]
    %v58 = vld [vmem:[%s0 + $0xf0] sm:$0xff]
    %v59 = vld [vmem:[%s0 + $0xf8] sm:$0xff]
    %v60 = vld [vmem:[%s0 + $0x100] sm:$0xff]
    %v61 = vld [vmem:[%s0 + $0x108] sm:$0xff]
    %v62 = vld [vmem:[%s0 + $0x110] sm:$0xff]
    %v63 = vld [vmem:[%s0 + $0x118] sm:$0xff]
    %v64 = vld [vmem:[%s0 + $0x120] sm:$0xff]
    %v65 = vld [vmem:[%s0 + $0x128] sm:$0xff]
    %v66 = vld [vmem:[%s0 + $0x130] sm:$0xff]
    %v67 = vld [vmem:[%s0 + $0x138] sm:$0xff]
    %v68 = vld [vmem:[%s0 + $0x140] sm:$0xff]
    %v69 = vld [vmem:[%s0 + $0x148] sm:$0xff]
    %v70 = vld [vmem:[%s0 + $0x150] sm:$0xff]
    %v71 = vld [vmem:[%s0 + $0x158] sm:$0xff]
    %v72 = vld [vmem:[%s0 + $0x160] sm:$0xff]
    %v73 = vld [vmem:[%s0 + $0x168] sm:$0xff]
    %v74 = vld [vmem:[%s0 + $0x170] sm:$0xff]
    %v75 = vld [vmem:[%s0 + $0x178] sm:$0xff]
    %v76 = vld [vmem:[%s0 + $0x180] sm:$0xff]
    %v77 = vld [vmem:[%s0 + $0x188] sm:$0xff]
    %v78 = vld [vmem:[%s0 + $0x190] sm:$0xff]
    %v79 = vld [vmem:[%s0 + $0x198] sm:$0xff]
    %v80 = vld [vmem:[%s0 + $0x1a0] sm:$0xff]
    %v81 = vld [vmem:[%s0 + $0x1a8] sm:$0xff]
    %v82 = vld [vmem:[%s0 + $0x1b0] sm:$0xff]
    %v83 = vld [vmem:[%s0 + $0x1b8] sm:$0xff]
    %v84 = vld [vmem:[%s0 + $0x1c0] sm:$0xff]
    %v85 = vld [vmem:[%s0 + $0x1c8] sm:$0xff]
    %v86 = vld [vmem:[%s0 + $0x1d0] sm:$0xff]
    %v87 = vld [vmem:[%s0 + $0x1d8] sm:$0xff]
    %v88 = vld [vmem:[%s0 + $0x1e0] sm:$0xff]
    %v89 = vld [vmem:[%s0 + $0x1e8] sm:$0xff]
    %v90 = vld [vmem:[%s0 + $0x1f0] sm:$0xff]
    %v91 = vld [vmem:[%s0 + $0x1f8] sm:$0xff]
    %v92 = vpack.c.bf16 %v29, %v28
    %v93 = vpack.c.bf16 %v31, %v30
    %v94 = vpack.c.bf16 %v33, %v32
    %v95 = vpack.c.bf16 %v35, %v34
    %v96 = vpack.c.bf16 %v37, %v36
    %v97 = vpack.c.bf16 %v39, %v38
    %v98 = vpack.c.bf16 %v41, %v40
    %v99 = vpack.c.bf16 %v43, %v42
    %v100 = vpack.c.bf16 %v45, %v44
    %v101 = vpack.c.bf16 %v47, %v46
    %v102 = vpack.c.bf16 %v49, %v48
    %v103 = vpack.c.bf16 %v51, %v50
    %v104 = vpack.c.bf16 %v53, %v52
    %v105 = vpack.c.bf16 %v55, %v54
    %v106 = vpack.c.bf16 %v57, %v56
    %v107 = vpack.c.bf16 %v59, %v58
    %v108 = vpack.c.bf16 %v61, %v60
    %v109 = vpack.c.bf16 %v63, %v62
    %v110 = vpack.c.bf16 %v65, %v64
    %v111 = vpack.c.bf16 %v67, %v66
    %v112 = vpack.c.bf16 %v69, %v68
    %v113 = vpack.c.bf16 %v71, %v70
    %v114 = vpack.c.bf16 %v73, %v72
    %v115 = vpack.c.bf16 %v75, %v74
    %v116 = vpack.c.bf16 %v77, %v76
    %v117 = vpack.c.bf16 %v79, %v78
    %v118 = vpack.c.bf16 %v81, %v80
    %v119 = vpack.c.bf16 %v83, %v82
    %v120 = vpack.c.bf16 %v85, %v84
    %v121 = vpack.c.bf16 %v87, %v86
    %v122 = vpack.c.bf16 %v89, %v88
    %v123 = vpack.c.bf16 %v91, %v90
    %v124 = vld [vmem:[%s1] sm:$0xf]
    %v125 = vld [vmem:[%s1 + $0x4] sm:$0xf]
    %v126 = vld [vmem:[%s1 + $0x8] sm:$0xf]
    %v127 = vld [vmem:[%s2] sm:$0x1]
    %v129 = vperm.slane %v127, 0
    %v134 = vunpack.c.l.b16 %v124
    %v135 = vunpack.c.l.b16 %v125
    %v136 = vunpack.c.l.b16 %v126
    %v137 = vpack.c.b16 %v135, %v134
    %v138 = vpack.c.b16 %v136, %v136
    %vm140 = vcmask 195584
    %v142 = vsel %vm140, %v92, 0
    %v145 = vsel %vm140, %v93, 0
    %v148 = vsel %vm140, %v94, 0
    %v151 = vsel %vm140, %v95, 0
    %v154 = vsel %vm140, %v96, 0
    %v157 = vsel %vm140, %v97, 0
    %v160 = vsel %vm140, %v98, 0
    %v163 = vsel %vm140, %v99, 0
    %v166 = vsel %vm140, %v100, 0
    %v169 = vsel %vm140, %v101, 0
    %v172 = vsel %vm140, %v102, 0
    %v175 = vsel %vm140, %v103, 0
    %v178 = vsel %vm140, %v104, 0
    %v181 = vsel %vm140, %v105, 0
    %v184 = vsel %vm140, %v106, 0
    %v187 = vsel %vm140, %v107, 0
    %v190 = vsel %vm140, %v108, 0
    %v193 = vsel %vm140, %v109, 0
    %v196 = vsel %vm140, %v110, 0
    %v199 = vsel %vm140, %v111, 0
    %v202 = vsel %vm140, %v112, 0
    %v205 = vsel %vm140, %v113, 0
    %v208 = vsel %vm140, %v114, 0
    %v211 = vsel %vm140, %v115, 0
    %v214 = vsel %vm140, %v116, 0
    %v217 = vsel %vm140, %v117, 0
    %v220 = vsel %vm140, %v118, 0
    %v223 = vsel %vm140, %v119, 0
    %v226 = vsel %vm140, %v120, 0
    %v229 = vsel %vm140, %v121, 0
    %v232 = vsel %vm140, %v122, 0
    %v235 = vsel %vm140, %v123, 0
    %vm237 = vcmask 1043456
    %v239 = vsel %vm237, %v138, 0
    %241 = vmatpush.bf16.msra.mxu0 0
    %242 = vmatpush.bf16.msra.mxu0 0
    %243 = vmatpush.bf16.msra.mxu0 0
    %244 = vmatpush.bf16.msra.mxu0 0
    %245 = vmatpush.bf16.msra.mxu0 0
    %246 = vmatpush.bf16.msra.mxu0 0
    %247 = vmatpush.bf16.msra.mxu0 %v239
    %248 = vmatpush.bf16.msra.mxu0 %v137
    %249 = vmatmul.bf16.gmra.mxu0 %v142
    %v250 = vpop.f32.mrf.mxu0
    %v251 = vadd.f32 %v129, %v250
    %v252 = vpop.f32.mrf.mxu0
    %v253 = vadd.f32 %v129, %v252
    %254 = vmatmul.bf16.gmra.mxu0 %v145
    %v255 = vpop.f32.mrf.mxu0
    %v256 = vadd.f32 %v129, %v255
    %v257 = vpop.f32.mrf.mxu0
    %v258 = vadd.f32 %v129, %v257
    %259 = vmatmul.bf16.gmra.mxu0 %v148
    %v260 = vpop.f32.mrf.mxu0
    %v261 = vadd.f32 %v129, %v260
    %v262 = vpop.f32.mrf.mxu0
    %v263 = vadd.f32 %v129, %v262
    %264 = vmatmul.bf16.gmra.mxu0 %v151
    %v265 = vpop.f32.mrf.mxu0
    %v266 = vadd.f32 %v129, %v265
    %v267 = vpop.f32.mrf.mxu0
    %v268 = vadd.f32 %v129, %v267
    %269 = vmatmul.bf16.gmra.mxu0 %v154
    %v270 = vpop.f32.mrf.mxu0
    %v271 = vadd.f32 %v129, %v270
    %v272 = vpop.f32.mrf.mxu0
    %v273 = vadd.f32 %v129, %v272
    %274 = vmatmul.bf16.gmra.mxu0 %v157
    %v275 = vpop.f32.mrf.mxu0
    %v276 = vadd.f32 %v129, %v275
    %v277 = vpop.f32.mrf.mxu0
    %v278 = vadd.f32 %v129, %v277
    %279 = vmatmul.bf16.gmra.mxu0 %v160
    %v280 = vpop.f32.mrf.mxu0
    %v281 = vadd.f32 %v129, %v280
    %v282 = vpop.f32.mrf.mxu0
    %v283 = vadd.f32 %v129, %v282
    %284 = vmatmul.bf16.gmra.mxu0 %v163
    %v285 = vpop.f32.mrf.mxu0
    %v286 = vadd.f32 %v129, %v285
    %v287 = vpop.f32.mrf.mxu0
    %v288 = vadd.f32 %v129, %v287
    %289 = vmatmul.bf16.gmra.mxu0 %v166
    %v290 = vpop.f32.mrf.mxu0
    %v291 = vadd.f32 %v129, %v290
    %v292 = vpop.f32.mrf.mxu0
    %v293 = vadd.f32 %v129, %v292
    %294 = vmatmul.bf16.gmra.mxu0 %v169
    %v295 = vpop.f32.mrf.mxu0
    %v296 = vadd.f32 %v129, %v295
    %v297 = vpop.f32.mrf.mxu0
    %v298 = vadd.f32 %v129, %v297
    %299 = vmatmul.bf16.gmra.mxu0 %v172
    %v300 = vpop.f32.mrf.mxu0
    %v301 = vadd.f32 %v129, %v300
    %v302 = vpop.f32.mrf.mxu0
    %v303 = vadd.f32 %v129, %v302
    %304 = vmatmul.bf16.gmra.mxu0 %v175
    %v305 = vpop.f32.mrf.mxu0
    %v306 = vadd.f32 %v129, %v305
    %v307 = vpop.f32.mrf.mxu0
    %v308 = vadd.f32 %v129, %v307
    %309 = vmatmul.bf16.gmra.mxu0 %v178
    %v310 = vpop.f32.mrf.mxu0
    %v311 = vadd.f32 %v129, %v310
    %v312 = vpop.f32.mrf.mxu0
    %v313 = vadd.f32 %v129, %v312
    %314 = vmatmul.bf16.gmra.mxu0 %v181
    %v315 = vpop.f32.mrf.mxu0
    %v316 = vadd.f32 %v129, %v315
    %v317 = vpop.f32.mrf.mxu0
    %v318 = vadd.f32 %v129, %v317
    %319 = vmatmul.bf16.gmra.mxu0 %v184
    %v320 = vpop.f32.mrf.mxu0
    %v321 = vadd.f32 %v129, %v320
    %v322 = vpop.f32.mrf.mxu0
    %v323 = vadd.f32 %v129, %v322
    %324 = vmatmul.bf16.gmra.mxu0 %v187
    %v325 = vpop.f32.mrf.mxu0
    %v326 = vadd.f32 %v129, %v325
    %v327 = vpop.f32.mrf.mxu0
    %v328 = vadd.f32 %v129, %v327
    %329 = vmatmul.bf16.gmra.mxu0 %v190
    %v330 = vpop.f32.mrf.mxu0
    %v331 = vadd.f32 %v129, %v330
    %v332 = vpop.f32.mrf.mxu0
    %v333 = vadd.f32 %v129, %v332
    %334 = vmatmul.bf16.gmra.mxu0 %v193
    %v335 = vpop.f32.mrf.mxu0
    %v336 = vadd.f32 %v129, %v335
    %v337 = vpop.f32.mrf.mxu0
    %v338 = vadd.f32 %v129, %v337
    %339 = vmatmul.bf16.gmra.mxu0 %v196
    %v340 = vpop.f32.mrf.mxu0
    %v341 = vadd.f32 %v129, %v340
    %v342 = vpop.f32.mrf.mxu0
    %v343 = vadd.f32 %v129, %v342
    %344 = vmatmul.bf16.gmra.mxu0 %v199
    %v345 = vpop.f32.mrf.mxu0
    %v346 = vadd.f32 %v129, %v345
    %v347 = vpop.f32.mrf.mxu0
    %v348 = vadd.f32 %v129, %v347
    %349 = vmatmul.bf16.gmra.mxu0 %v202
    %v350 = vpop.f32.mrf.mxu0
    %v351 = vadd.f32 %v129, %v350
    %v352 = vpop.f32.mrf.mxu0
    %v353 = vadd.f32 %v129, %v352
    %354 = vmatmul.bf16.gmra.mxu0 %v205
    %v355 = vpop.f32.mrf.mxu0
    %v356 = vadd.f32 %v129, %v355
    %v357 = vpop.f32.mrf.mxu0
    %v358 = vadd.f32 %v129, %v357
    %359 = vmatmul.bf16.gmra.mxu0 %v208
    %v360 = vpop.f32.mrf.mxu0
    %v361 = vadd.f32 %v129, %v360
    %v362 = vpop.f32.mrf.mxu0
    %v363 = vadd.f32 %v129, %v362
    %364 = vmatmul.bf16.gmra.mxu0 %v211
    %v365 = vpop.f32.mrf.mxu0
    %v366 = vadd.f32 %v129, %v365
    %v367 = vpop.f32.mrf.mxu0
    %v368 = vadd.f32 %v129, %v367
    %369 = vmatmul.bf16.gmra.mxu0 %v214
    %v370 = vpop.f32.mrf.mxu0
    %v371 = vadd.f32 %v129, %v370
    %v372 = vpop.f32.mrf.mxu0
    %v373 = vadd.f32 %v129, %v372
    %374 = vmatmul.bf16.gmra.mxu0 %v217
    %v375 = vpop.f32.mrf.mxu0
    %v376 = vadd.f32 %v129, %v375
    %v377 = vpop.f32.mrf.mxu0
    %v378 = vadd.f32 %v129, %v377
    %379 = vmatmul.bf16.gmra.mxu0 %v220
    %v380 = vpop.f32.mrf.mxu0
    %v381 = vadd.f32 %v129, %v380
    %v382 = vpop.f32.mrf.mxu0
    %v383 = vadd.f32 %v129, %v382
    %384 = vmatmul.bf16.gmra.mxu0 %v223
    %v385 = vpop.f32.mrf.mxu0
    %v386 = vadd.f32 %v129, %v385
    %v387 = vpop.f32.mrf.mxu0
    %v388 = vadd.f32 %v129, %v387
    %389 = vmatmul.bf16.gmra.mxu0 %v226
    %v390 = vpop.f32.mrf.mxu0
    %v391 = vadd.f32 %v129, %v390
    %v392 = vpop.f32.mrf.mxu0
    %v393 = vadd.f32 %v129, %v392
    %394 = vmatmul.bf16.gmra.mxu0 %v229
    %v395 = vpop.f32.mrf.mxu0
    %v396 = vadd.f32 %v129, %v395
    %v397 = vpop.f32.mrf.mxu0
    %v398 = vadd.f32 %v129, %v397
    %399 = vmatmul.bf16.gmra.mxu0 %v232
    %v400 = vpop.f32.mrf.mxu0
    %v401 = vadd.f32 %v129, %v400
    %v402 = vpop.f32.mrf.mxu0
    %v403 = vadd.f32 %v129, %v402
    %404 = vmatmul.bf16.gmra.mxu0 %v235
    %v405 = vpop.f32.mrf.mxu0
    %v406 = vadd.f32 %v129, %v405
    %v407 = vpop.f32.mrf.mxu0
    %v408 = vadd.f32 %v129, %v407
    %409 = vdwg.mxu0
    %v410 = vmax.f32 %v251, 0.0
    %v411 = vmax.f32 %v253, 0.0
    %v412 = vmax.f32 %v256, 0.0
    %v413 = vmax.f32 %v258, 0.0
    %v414 = vmax.f32 %v261, 0.0
    %v415 = vmax.f32 %v263, 0.0
    %v416 = vmax.f32 %v266, 0.0
    %v417 = vmax.f32 %v268, 0.0
    %v418 = vmax.f32 %v271, 0.0
    %v419 = vmax.f32 %v273, 0.0
    %v420 = vmax.f32 %v276, 0.0
    %v421 = vmax.f32 %v278, 0.0
    %v422 = vmax.f32 %v281, 0.0
    %v423 = vmax.f32 %v283, 0.0
    %v424 = vmax.f32 %v286, 0.0
    %v425 = vmax.f32 %v288, 0.0
    %v426 = vmax.f32 %v291, 0.0
    %v427 = vmax.f32 %v293, 0.0
    %v428 = vmax.f32 %v296, 0.0
    %v429 = vmax.f32 %v298, 0.0
    %v430 = vmax.f32 %v301, 0.0
    %v431 = vmax.f32 %v303, 0.0
    %v432 = vmax.f32 %v306, 0.0
    %v433 = vmax.f32 %v308, 0.0
    %v434 = vmax.f32 %v311, 0.0
    %v435 = vmax.f32 %v313, 0.0
    %v436 = vmax.f32 %v316, 0.0
    %v437 = vmax.f32 %v318, 0.0
    %v438 = vmax.f32 %v321, 0.0
    %v439 = vmax.f32 %v323, 0.0
    %v440 = vmax.f32 %v326, 0.0
    %v441 = vmax.f32 %v328, 0.0
    %v442 = vmax.f32 %v331, 0.0
    %v443 = vmax.f32 %v333, 0.0
    %v444 = vmax.f32 %v336, 0.0
    %v445 = vmax.f32 %v338, 0.0
    %v446 = vmax.f32 %v341, 0.0
    %v447 = vmax.f32 %v343, 0.0
    %v448 = vmax.f32 %v346, 0.0
    %v449 = vmax.f32 %v348, 0.0
    %v450 = vmax.f32 %v351, 0.0
    %v451 = vmax.f32 %v353, 0.0
    %v452 = vmax.f32 %v356, 0.0
    %v453 = vmax.f32 %v358, 0.0
    %v454 = vmax.f32 %v361, 0.0
    %v455 = vmax.f32 %v363, 0.0
    %v456 = vmax.f32 %v366, 0.0
    %v457 = vmax.f32 %v368, 0.0
    %v458 = vmax.f32 %v371, 0.0
    %v459 = vmax.f32 %v373, 0.0
    %v460 = vmax.f32 %v376, 0.0
    %v461 = vmax.f32 %v378, 0.0
    %v462 = vmax.f32 %v381, 0.0
    %v463 = vmax.f32 %v383, 0.0
    %v464 = vmax.f32 %v386, 0.0
    %v465 = vmax.f32 %v388, 0.0
    %v466 = vmax.f32 %v391, 0.0
    %v467 = vmax.f32 %v393, 0.0
    %v468 = vmax.f32 %v396, 0.0
    %v469 = vmax.f32 %v398, 0.0
    %v470 = vmax.f32 %v401, 0.0
    %v471 = vmax.f32 %v403, 0.0
    %v472 = vmax.f32 %v406, 0.0
    %v473 = vmax.f32 %v408, 0.0
    %v474 = vpack.c.bf16 %v411, %v410
    %v475 = vpack.c.bf16 %v413, %v412
    %v476 = vpack.c.bf16 %v415, %v414
    %v477 = vpack.c.bf16 %v417, %v416
    %v478 = vpack.c.bf16 %v419, %v418
    %v479 = vpack.c.bf16 %v421, %v420
    %v480 = vpack.c.bf16 %v423, %v422
    %v481 = vpack.c.bf16 %v425, %v424
    %v482 = vpack.c.bf16 %v427, %v426
    %v483 = vpack.c.bf16 %v429, %v428
    %v484 = vpack.c.bf16 %v431, %v430
    %v485 = vpack.c.bf16 %v433, %v432
    %v486 = vpack.c.bf16 %v435, %v434
    %v487 = vpack.c.bf16 %v437, %v436
    %v488 = vpack.c.bf16 %v439, %v438
    %v489 = vpack.c.bf16 %v441, %v440
    %v490 = vpack.c.bf16 %v443, %v442
    %v491 = vpack.c.bf16 %v445, %v444
    %v492 = vpack.c.bf16 %v447, %v446
    %v493 = vpack.c.bf16 %v449, %v448
    %v494 = vpack.c.bf16 %v451, %v450
    %v495 = vpack.c.bf16 %v453, %v452
    %v496 = vpack.c.bf16 %v455, %v454
    %v497 = vpack.c.bf16 %v457, %v456
    %v498 = vpack.c.bf16 %v459, %v458
    %v499 = vpack.c.bf16 %v461, %v460
    %v500 = vpack.c.bf16 %v463, %v462
    %v501 = vpack.c.bf16 %v465, %v464
    %v502 = vpack.c.bf16 %v467, %v466
    %v503 = vpack.c.bf16 %v469, %v468
    %v504 = vpack.c.bf16 %v471, %v470
    %v505 = vpack.c.bf16 %v473, %v472
    %v506 = vld [vmem:[%s3] sm:$0xf]
    %v507 = vld [vmem:[%s3 + $0x4] sm:$0xf]
    %v508 = vld [vmem:[%s3 + $0x8] sm:$0xf]
    %v509 = vld [vmem:[%s3 + $0xc] sm:$0xf]
    %v510 = vld [vmem:[%s3 + $0x10] sm:$0xf]
    %v511 = vld [vmem:[%s3 + $0x14] sm:$0xf]
    %v512 = vld [vmem:[%s3 + $0x18] sm:$0xf]
    %v513 = vld [vmem:[%s3 + $0x1c] sm:$0xf]
    %v514 = vld [vmem:[%s3 + $0x20] sm:$0xf]
    %v515 = vld [vmem:[%s3 + $0x24] sm:$0xf]
    %v516 = vld [vmem:[%s3 + $0x28] sm:$0xf]
    %v517 = vld [vmem:[%s3 + $0x2c] sm:$0xf]
    %v518 = vld [vmem:[%s3 + $0x30] sm:$0xf]
    %v519 = vld [vmem:[%s3 + $0x34] sm:$0xf]
    %v520 = vld [vmem:[%s3 + $0x38] sm:$0xf]
    %v521 = vld [vmem:[%s3 + $0x3c] sm:$0xf]
    %v522 = vld [vmem:[%s4] sm:$0x1]
    %v524 = vperm.slane %v522, 0
    %v542 = vunpack.c.l.b16 %v506
    %v543 = vunpack.c.l.b16 %v507
    %v544 = vunpack.c.l.b16 %v508
    %v545 = vunpack.c.l.b16 %v509
    %v546 = vunpack.c.l.b16 %v510
    %v547 = vunpack.c.l.b16 %v511
    %v548 = vunpack.c.l.b16 %v512
    %v549 = vunpack.c.l.b16 %v513
    %v550 = vunpack.c.l.b16 %v514
    %v551 = vunpack.c.l.b16 %v515
    %v552 = vunpack.c.l.b16 %v516
    %v553 = vunpack.c.l.b16 %v517
    %v554 = vunpack.c.l.b16 %v518
    %v555 = vunpack.c.l.b16 %v519
    %v556 = vunpack.c.l.b16 %v520
    %v557 = vunpack.c.l.b16 %v521
    %v558 = vpack.c.b16 %v543, %v542
    %v559 = vpack.c.b16 %v545, %v544
    %v560 = vpack.c.b16 %v547, %v546
    %v561 = vpack.c.b16 %v549, %v548
    %v562 = vpack.c.b16 %v551, %v550
    %v563 = vpack.c.b16 %v553, %v552
    %v564 = vpack.c.b16 %v555, %v554
    %v565 = vpack.c.b16 %v557, %v556
    %574 = vmatpush.bf16.msra.mxu0 %v565
    %575 = vmatpush.bf16.msra.mxu0 %v564
    %576 = vmatpush.bf16.msra.mxu0 %v563
    %577 = vmatpush.bf16.msra.mxu0 %v562
    %578 = vmatpush.bf16.msra.mxu0 %v561
    %579 = vmatpush.bf16.msra.mxu0 %v560
    %580 = vmatpush.bf16.msra.mxu0 %v559
    %581 = vmatpush.bf16.msra.mxu0 %v558
    %582 = vmatmul.bf16.gmra.mxu0 %v474
    %v583 = vpop.f32.mrf.mxu0
    %v584 = vadd.f32 %v524, %v583
    %v585 = vpop.f32.mrf.mxu0
    %v586 = vadd.f32 %v524, %v585
    %587 = vmatmul.bf16.gmra.mxu0 %v475
    %v588 = vpop.f32.mrf.mxu0
    %v589 = vadd.f32 %v524, %v588
    %v590 = vpop.f32.mrf.mxu0
    %v591 = vadd.f32 %v524, %v590
    %592 = vmatmul.bf16.gmra.mxu0 %v476
    %v593 = vpop.f32.mrf.mxu0
    %v594 = vadd.f32 %v524, %v593
    %v595 = vpop.f32.mrf.mxu0
    %v596 = vadd.f32 %v524, %v595
    %597 = vmatmul.bf16.gmra.mxu0 %v477
    %v598 = vpop.f32.mrf.mxu0
    %v599 = vadd.f32 %v524, %v598
    %v600 = vpop.f32.mrf.mxu0
    %v601 = vadd.f32 %v524, %v600
    %602 = vmatmul.bf16.gmra.mxu0 %v478
    %v603 = vpop.f32.mrf.mxu0
    %v604 = vadd.f32 %v524, %v603
    %v605 = vpop.f32.mrf.mxu0
    %v606 = vadd.f32 %v524, %v605
    %607 = vmatmul.bf16.gmra.mxu0 %v479
    %v608 = vpop.f32.mrf.mxu0
    %v609 = vadd.f32 %v524, %v608
    %v610 = vpop.f32.mrf.mxu0
    %v611 = vadd.f32 %v524, %v610
    %612 = vmatmul.bf16.gmra.mxu0 %v480
    %v613 = vpop.f32.mrf.mxu0
    %v614 = vadd.f32 %v524, %v613
    %v615 = vpop.f32.mrf.mxu0
    %v616 = vadd.f32 %v524, %v615
    %617 = vmatmul.bf16.gmra.mxu0 %v481
    %v618 = vpop.f32.mrf.mxu0
    %v619 = vadd.f32 %v524, %v618
    %v620 = vpop.f32.mrf.mxu0
    %v621 = vadd.f32 %v524, %v620
    %622 = vmatmul.bf16.gmra.mxu0 %v482
    %v623 = vpop.f32.mrf.mxu0
    %v624 = vadd.f32 %v524, %v623
    %v625 = vpop.f32.mrf.mxu0
    %v626 = vadd.f32 %v524, %v625
    %627 = vmatmul.bf16.gmra.mxu0 %v483
    %v628 = vpop.f32.mrf.mxu0
    %v629 = vadd.f32 %v524, %v628
    %v630 = vpop.f32.mrf.mxu0
    %v631 = vadd.f32 %v524, %v630
    %632 = vmatmul.bf16.gmra.mxu0 %v484
    %v633 = vpop.f32.mrf.mxu0
    %v634 = vadd.f32 %v524, %v633
    %v635 = vpop.f32.mrf.mxu0
    %v636 = vadd.f32 %v524, %v635
    %637 = vmatmul.bf16.gmra.mxu0 %v485
    %v638 = vpop.f32.mrf.mxu0
    %v639 = vadd.f32 %v524, %v638
    %v640 = vpop.f32.mrf.mxu0
    %v641 = vadd.f32 %v524, %v640
    %642 = vmatmul.bf16.gmra.mxu0 %v486
    %v643 = vpop.f32.mrf.mxu0
    %v644 = vadd.f32 %v524, %v643
    %v645 = vpop.f32.mrf.mxu0
    %v646 = vadd.f32 %v524, %v645
    %647 = vmatmul.bf16.gmra.mxu0 %v487
    %v648 = vpop.f32.mrf.mxu0
    %v649 = vadd.f32 %v524, %v648
    %v650 = vpop.f32.mrf.mxu0
    %v651 = vadd.f32 %v524, %v650
    %652 = vmatmul.bf16.gmra.mxu0 %v488
    %v653 = vpop.f32.mrf.mxu0
    %v654 = vadd.f32 %v524, %v653
    %v655 = vpop.f32.mrf.mxu0
    %v656 = vadd.f32 %v524, %v655
    %657 = vmatmul.bf16.gmra.mxu0 %v489
    %v658 = vpop.f32.mrf.mxu0
    %v659 = vadd.f32 %v524, %v658
    %v660 = vpop.f32.mrf.mxu0
    %v661 = vadd.f32 %v524, %v660
    %662 = vmatmul.bf16.gmra.mxu0 %v490
    %v663 = vpop.f32.mrf.mxu0
    %v664 = vadd.f32 %v524, %v663
    %v665 = vpop.f32.mrf.mxu0
    %v666 = vadd.f32 %v524, %v665
    %667 = vmatmul.bf16.gmra.mxu0 %v491
    %v668 = vpop.f32.mrf.mxu0
    %v669 = vadd.f32 %v524, %v668
    %v670 = vpop.f32.mrf.mxu0
    %v671 = vadd.f32 %v524, %v670
    %672 = vmatmul.bf16.gmra.mxu0 %v492
    %v673 = vpop.f32.mrf.mxu0
    %v674 = vadd.f32 %v524, %v673
    %v675 = vpop.f32.mrf.mxu0
    %v676 = vadd.f32 %v524, %v675
    %677 = vmatmul.bf16.gmra.mxu0 %v493
    %v678 = vpop.f32.mrf.mxu0
    %v679 = vadd.f32 %v524, %v678
    %v680 = vpop.f32.mrf.mxu0
    %v681 = vadd.f32 %v524, %v680
    %682 = vmatmul.bf16.gmra.mxu0 %v494
    %v683 = vpop.f32.mrf.mxu0
    %v684 = vadd.f32 %v524, %v683
    %v685 = vpop.f32.mrf.mxu0
    %v686 = vadd.f32 %v524, %v685
    %687 = vmatmul.bf16.gmra.mxu0 %v495
    %v688 = vpop.f32.mrf.mxu0
    %v689 = vadd.f32 %v524, %v688
    %v690 = vpop.f32.mrf.mxu0
    %v691 = vadd.f32 %v524, %v690
    %692 = vmatmul.bf16.gmra.mxu0 %v496
    %v693 = vpop.f32.mrf.mxu0
    %v694 = vadd.f32 %v524, %v693
    %v695 = vpop.f32.mrf.mxu0
    %v696 = vadd.f32 %v524, %v695
    %697 = vmatmul.bf16.gmra.mxu0 %v497
    %v698 = vpop.f32.mrf.mxu0
    %v699 = vadd.f32 %v524, %v698
    %v700 = vpop.f32.mrf.mxu0
    %v701 = vadd.f32 %v524, %v700
    %702 = vmatmul.bf16.gmra.mxu0 %v498
    %v703 = vpop.f32.mrf.mxu0
    %v704 = vadd.f32 %v524, %v703
    %v705 = vpop.f32.mrf.mxu0
    %v706 = vadd.f32 %v524, %v705
    %707 = vmatmul.bf16.gmra.mxu0 %v499
    %v708 = vpop.f32.mrf.mxu0
    %v709 = vadd.f32 %v524, %v708
    %v710 = vpop.f32.mrf.mxu0
    %v711 = vadd.f32 %v524, %v710
    %712 = vmatmul.bf16.gmra.mxu0 %v500
    %v713 = vpop.f32.mrf.mxu0
    %v714 = vadd.f32 %v524, %v713
    %v715 = vpop.f32.mrf.mxu0
    %v716 = vadd.f32 %v524, %v715
    %717 = vmatmul.bf16.gmra.mxu0 %v501
    %v718 = vpop.f32.mrf.mxu0
    %v719 = vadd.f32 %v524, %v718
    %v720 = vpop.f32.mrf.mxu0
    %v721 = vadd.f32 %v524, %v720
    %722 = vmatmul.bf16.gmra.mxu0 %v502
    %v723 = vpop.f32.mrf.mxu0
    %v724 = vadd.f32 %v524, %v723
    %v725 = vpop.f32.mrf.mxu0
    %v726 = vadd.f32 %v524, %v725
    %727 = vmatmul.bf16.gmra.mxu0 %v503
    %v728 = vpop.f32.mrf.mxu0
    %v729 = vadd.f32 %v524, %v728
    %v730 = vpop.f32.mrf.mxu0
    %v731 = vadd.f32 %v524, %v730
    %732 = vmatmul.bf16.gmra.mxu0 %v504
    %v733 = vpop.f32.mrf.mxu0
    %v734 = vadd.f32 %v524, %v733
    %v735 = vpop.f32.mrf.mxu0
    %v736 = vadd.f32 %v524, %v735
    %737 = vmatmul.bf16.gmra.mxu0 %v505
    %v738 = vpop.f32.mrf.mxu0
    %v739 = vadd.f32 %v524, %v738
    %v740 = vpop.f32.mrf.mxu0
    %v741 = vadd.f32 %v524, %v740
    %742 = vdwg.mxu0
    %v743 = vmax.f32 %v584, 0.0
    %v744 = vmax.f32 %v586, 0.0
    %v745 = vmax.f32 %v589, 0.0
    %v746 = vmax.f32 %v591, 0.0
    %v747 = vmax.f32 %v594, 0.0
    %v748 = vmax.f32 %v596, 0.0
    %v749 = vmax.f32 %v599, 0.0
    %v750 = vmax.f32 %v601, 0.0
    %v751 = vmax.f32 %v604, 0.0
    %v752 = vmax.f32 %v606, 0.0
    %v753 = vmax.f32 %v609, 0.0
    %v754 = vmax.f32 %v611, 0.0
    %v755 = vmax.f32 %v614, 0.0
    %v756 = vmax.f32 %v616, 0.0
    %v757 = vmax.f32 %v619, 0.0
    %v758 = vmax.f32 %v621, 0.0
    %v759 = vmax.f32 %v624, 0.0
    %v760 = vmax.f32 %v626, 0.0
    %v761 = vmax.f32 %v629, 0.0
    %v762 = vmax.f32 %v631, 0.0
    %v763 = vmax.f32 %v634, 0.0
    %v764 = vmax.f32 %v636, 0.0
    %v765 = vmax.f32 %v639, 0.0
    %v766 = vmax.f32 %v641, 0.0
    %v767 = vmax.f32 %v644, 0.0
    %v768 = vmax.f32 %v646, 0.0
    %v769 = vmax.f32 %v649, 0.0
    %v770 = vmax.f32 %v651, 0.0
    %v771 = vmax.f32 %v654, 0.0
    %v772 = vmax.f32 %v656, 0.0
    %v773 = vmax.f32 %v659, 0.0
    %v774 = vmax.f32 %v661, 0.0
    %v775 = vmax.f32 %v664, 0.0
    %v776 = vmax.f32 %v666, 0.0
    %v777 = vmax.f32 %v669, 0.0
    %v778 = vmax.f32 %v671, 0.0
    %v779 = vmax.f32 %v674, 0.0
    %v780 = vmax.f32 %v676, 0.0
    %v781 = vmax.f32 %v679, 0.0
    %v782 = vmax.f32 %v681, 0.0
    %v783 = vmax.f32 %v684, 0.0
    %v784 = vmax.f32 %v686, 0.0
    %v785 = vmax.f32 %v689, 0.0
    %v786 = vmax.f32 %v691, 0.0
    %v787 = vmax.f32 %v694, 0.0
    %v788 = vmax.f32 %v696, 0.0
    %v789 = vmax.f32 %v699, 0.0
    %v790 = vmax.f32 %v701, 0.0
    %v791 = vmax.f32 %v704, 0.0
    %v792 = vmax.f32 %v706, 0.0
    %v793 = vmax.f32 %v709, 0.0
    %v794 = vmax.f32 %v711, 0.0
    %v795 = vmax.f32 %v714, 0.0
    %v796 = vmax.f32 %v716, 0.0
    %v797 = vmax.f32 %v719, 0.0
    %v798 = vmax.f32 %v721, 0.0
    %v799 = vmax.f32 %v724, 0.0
    %v800 = vmax.f32 %v726, 0.0
    %v801 = vmax.f32 %v729, 0.0
    %v802 = vmax.f32 %v731, 0.0
    %v803 = vmax.f32 %v734, 0.0
    %v804 = vmax.f32 %v736, 0.0
    %v805 = vmax.f32 %v739, 0.0
    %v806 = vmax.f32 %v741, 0.0
    %v807 = vpack.c.bf16 %v744, %v743
    %v808 = vpack.c.bf16 %v746, %v745
    %v809 = vpack.c.bf16 %v748, %v747
    %v810 = vpack.c.bf16 %v750, %v749
    %v811 = vpack.c.bf16 %v752, %v751
    %v812 = vpack.c.bf16 %v754, %v753
    %v813 = vpack.c.bf16 %v756, %v755
    %v814 = vpack.c.bf16 %v758, %v757
    %v815 = vpack.c.bf16 %v760, %v759
    %v816 = vpack.c.bf16 %v762, %v761
    %v817 = vpack.c.bf16 %v764, %v763
    %v818 = vpack.c.bf16 %v766, %v765
    %v819 = vpack.c.bf16 %v768, %v767
    %v820 = vpack.c.bf16 %v770, %v769
    %v821 = vpack.c.bf16 %v772, %v771
    %v822 = vpack.c.bf16 %v774, %v773
    %v823 = vpack.c.bf16 %v776, %v775
    %v824 = vpack.c.bf16 %v778, %v777
    %v825 = vpack.c.bf16 %v780, %v779
    %v826 = vpack.c.bf16 %v782, %v781
    %v827 = vpack.c.bf16 %v784, %v783
    %v828 = vpack.c.bf16 %v786, %v785
    %v829 = vpack.c.bf16 %v788, %v787
    %v830 = vpack.c.bf16 %v790, %v789
    %v831 = vpack.c.bf16 %v792, %v791
    %v832 = vpack.c.bf16 %v794, %v793
    %v833 = vpack.c.bf16 %v796, %v795
    %v834 = vpack.c.bf16 %v798, %v797
    %v835 = vpack.c.bf16 %v800, %v799
    %v836 = vpack.c.bf16 %v802, %v801
    %v837 = vpack.c.bf16 %v804, %v803
    %v838 = vpack.c.bf16 %v806, %v805
    %v839 = vld [vmem:[%s5] sm:$0xf]
    %v840 = vld [vmem:[%s5 + $0x4] sm:$0xf]
    %v841 = vld [vmem:[%s5 + $0x8] sm:$0xf]
    %v842 = vld [vmem:[%s5 + $0xc] sm:$0xf]
    %v843 = vld [vmem:[%s5 + $0x10] sm:$0xf]
    %v844 = vld [vmem:[%s5 + $0x14] sm:$0xf]
    %v845 = vld [vmem:[%s5 + $0x18] sm:$0xf]
    %v846 = vld [vmem:[%s5 + $0x1c] sm:$0xf]
    %v847 = vld [vmem:[%s5 + $0x20] sm:$0xf]
    %v848 = vld [vmem:[%s5 + $0x24] sm:$0xf]
    %v849 = vld [vmem:[%s5 + $0x28] sm:$0xf]
    %v850 = vld [vmem:[%s5 + $0x2c] sm:$0xf]
    %v851 = vld [vmem:[%s5 + $0x30] sm:$0xf]
    %v852 = vld [vmem:[%s5 + $0x34] sm:$0xf]
    %v853 = vld [vmem:[%s5 + $0x38] sm:$0xf]
    %v854 = vld [vmem:[%s5 + $0x3c] sm:$0xf]
    %v855 = vld [vmem:[%s6] sm:$0x1]
    %v857 = vperm.slane %v855, 0
    %v875 = vunpack.c.l.b16 %v839
    %v876 = vunpack.c.l.b16 %v840
    %v877 = vunpack.c.l.b16 %v841
    %v878 = vunpack.c.l.b16 %v842
    %v879 = vunpack.c.l.b16 %v843
    %v880 = vunpack.c.l.b16 %v844
    %v881 = vunpack.c.l.b16 %v845
    %v882 = vunpack.c.l.b16 %v846
    %v883 = vunpack.c.l.b16 %v847
    %v884 = vunpack.c.l.b16 %v848
    %v885 = vunpack.c.l.b16 %v849
    %v886 = vunpack.c.l.b16 %v850
    %v887 = vunpack.c.l.b16 %v851
    %v888 = vunpack.c.l.b16 %v852
    %v889 = vunpack.c.l.b16 %v853
    %v890 = vunpack.c.l.b16 %v854
    %v891 = vpack.c.b16 %v876, %v875
    %v892 = vpack.c.b16 %v878, %v877
    %v893 = vpack.c.b16 %v880, %v879
    %v894 = vpack.c.b16 %v882, %v881
    %v895 = vpack.c.b16 %v884, %v883
    %v896 = vpack.c.b16 %v886, %v885
    %v897 = vpack.c.b16 %v888, %v887
    %v898 = vpack.c.b16 %v890, %v889
    %907 = vmatpush.bf16.msra.mxu0 %v898
    %908 = vmatpush.bf16.msra.mxu0 %v897
    %909 = vmatpush.bf16.msra.mxu0 %v896
    %910 = vmatpush.bf16.msra.mxu0 %v895
    %911 = vmatpush.bf16.msra.mxu0 %v894
    %912 = vmatpush.bf16.msra.mxu0 %v893
    %913 = vmatpush.bf16.msra.mxu0 %v892
    %914 = vmatpush.bf16.msra.mxu0 %v891
    %915 = vmatmul.bf16.gmra.mxu0 %v807
    %v916 = vpop.f32.mrf.mxu0
    %v917 = vadd.f32 %v857, %v916
    %v918 = vpop.f32.mrf.mxu0
    %v919 = vadd.f32 %v857, %v918
    %920 = vmatmul.bf16.gmra.mxu0 %v808
    %v921 = vpop.f32.mrf.mxu0
    %v922 = vadd.f32 %v857, %v921
    %v923 = vpop.f32.mrf.mxu0
    %v924 = vadd.f32 %v857, %v923
    %925 = vmatmul.bf16.gmra.mxu0 %v809
    %v926 = vpop.f32.mrf.mxu0
    %v927 = vadd.f32 %v857, %v926
    %v928 = vpop.f32.mrf.mxu0
    %v929 = vadd.f32 %v857, %v928
    %930 = vmatmul.bf16.gmra.mxu0 %v810
    %v931 = vpop.f32.mrf.mxu0
    %v932 = vadd.f32 %v857, %v931
    %v933 = vpop.f32.mrf.mxu0
    %v934 = vadd.f32 %v857, %v933
    %935 = vmatmul.bf16.gmra.mxu0 %v811
    %v936 = vpop.f32.mrf.mxu0
    %v937 = vadd.f32 %v857, %v936
    %v938 = vpop.f32.mrf.mxu0
    %v939 = vadd.f32 %v857, %v938
    %940 = vmatmul.bf16.gmra.mxu0 %v812
    %v941 = vpop.f32.mrf.mxu0
    %v942 = vadd.f32 %v857, %v941
    %v943 = vpop.f32.mrf.mxu0
    %v944 = vadd.f32 %v857, %v943
    %945 = vmatmul.bf16.gmra.mxu0 %v813
    %v946 = vpop.f32.mrf.mxu0
    %v947 = vadd.f32 %v857, %v946
    %v948 = vpop.f32.mrf.mxu0
    %v949 = vadd.f32 %v857, %v948
    %950 = vmatmul.bf16.gmra.mxu0 %v814
    %v951 = vpop.f32.mrf.mxu0
    %v952 = vadd.f32 %v857, %v951
    %v953 = vpop.f32.mrf.mxu0
    %v954 = vadd.f32 %v857, %v953
    %955 = vmatmul.bf16.gmra.mxu0 %v815
    %v956 = vpop.f32.mrf.mxu0
    %v957 = vadd.f32 %v857, %v956
    %v958 = vpop.f32.mrf.mxu0
    %v959 = vadd.f32 %v857, %v958
    %960 = vmatmul.bf16.gmra.mxu0 %v816
    %v961 = vpop.f32.mrf.mxu0
    %v962 = vadd.f32 %v857, %v961
    %v963 = vpop.f32.mrf.mxu0
    %v964 = vadd.f32 %v857, %v963
    %965 = vmatmul.bf16.gmra.mxu0 %v817
    %v966 = vpop.f32.mrf.mxu0
    %v967 = vadd.f32 %v857, %v966
    %v968 = vpop.f32.mrf.mxu0
    %v969 = vadd.f32 %v857, %v968
    %970 = vmatmul.bf16.gmra.mxu0 %v818
    %v971 = vpop.f32.mrf.mxu0
    %v972 = vadd.f32 %v857, %v971
    %v973 = vpop.f32.mrf.mxu0
    %v974 = vadd.f32 %v857, %v973
    %975 = vmatmul.bf16.gmra.mxu0 %v819
    %v976 = vpop.f32.mrf.mxu0
    %v977 = vadd.f32 %v857, %v976
    %v978 = vpop.f32.mrf.mxu0
    %v979 = vadd.f32 %v857, %v978
    %980 = vmatmul.bf16.gmra.mxu0 %v820
    %v981 = vpop.f32.mrf.mxu0
    %v982 = vadd.f32 %v857, %v981
    %v983 = vpop.f32.mrf.mxu0
    %v984 = vadd.f32 %v857, %v983
    %985 = vmatmul.bf16.gmra.mxu0 %v821
    %v986 = vpop.f32.mrf.mxu0
    %v987 = vadd.f32 %v857, %v986
    %v988 = vpop.f32.mrf.mxu0
    %v989 = vadd.f32 %v857, %v988
    %990 = vmatmul.bf16.gmra.mxu0 %v822
    %v991 = vpop.f32.mrf.mxu0
    %v992 = vadd.f32 %v857, %v991
    %v993 = vpop.f32.mrf.mxu0
    %v994 = vadd.f32 %v857, %v993
    %995 = vmatmul.bf16.gmra.mxu0 %v823
    %v996 = vpop.f32.mrf.mxu0
    %v997 = vadd.f32 %v857, %v996
    %v998 = vpop.f32.mrf.mxu0
    %v999 = vadd.f32 %v857, %v998
    %1000 = vmatmul.bf16.gmra.mxu0 %v824
    %v1001 = vpop.f32.mrf.mxu0
    %v1002 = vadd.f32 %v857, %v1001
    %v1003 = vpop.f32.mrf.mxu0
    %v1004 = vadd.f32 %v857, %v1003
    %1005 = vmatmul.bf16.gmra.mxu0 %v825
    %v1006 = vpop.f32.mrf.mxu0
    %v1007 = vadd.f32 %v857, %v1006
    %v1008 = vpop.f32.mrf.mxu0
    %v1009 = vadd.f32 %v857, %v1008
    %1010 = vmatmul.bf16.gmra.mxu0 %v826
    %v1011 = vpop.f32.mrf.mxu0
    %v1012 = vadd.f32 %v857, %v1011
    %v1013 = vpop.f32.mrf.mxu0
    %v1014 = vadd.f32 %v857, %v1013
    %1015 = vmatmul.bf16.gmra.mxu0 %v827
    %v1016 = vpop.f32.mrf.mxu0
    %v1017 = vadd.f32 %v857, %v1016
    %v1018 = vpop.f32.mrf.mxu0
    %v1019 = vadd.f32 %v857, %v1018
    %1020 = vmatmul.bf16.gmra.mxu0 %v828
    %v1021 = vpop.f32.mrf.mxu0
    %v1022 = vadd.f32 %v857, %v1021
    %v1023 = vpop.f32.mrf.mxu0
    %v1024 = vadd.f32 %v857, %v1023
    %1025 = vmatmul.bf16.gmra.mxu0 %v829
    %v1026 = vpop.f32.mrf.mxu0
    %v1027 = vadd.f32 %v857, %v1026
    %v1028 = vpop.f32.mrf.mxu0
    %v1029 = vadd.f32 %v857, %v1028
    %1030 = vmatmul.bf16.gmra.mxu0 %v830
    %v1031 = vpop.f32.mrf.mxu0
    %v1032 = vadd.f32 %v857, %v1031
    %v1033 = vpop.f32.mrf.mxu0
    %v1034 = vadd.f32 %v857, %v1033
    %1035 = vmatmul.bf16.gmra.mxu0 %v831
    %v1036 = vpop.f32.mrf.mxu0
    %v1037 = vadd.f32 %v857, %v1036
    %v1038 = vpop.f32.mrf.mxu0
    %v1039 = vadd.f32 %v857, %v1038
    %1040 = vmatmul.bf16.gmra.mxu0 %v832
    %v1041 = vpop.f32.mrf.mxu0
    %v1042 = vadd.f32 %v857, %v1041
    %v1043 = vpop.f32.mrf.mxu0
    %v1044 = vadd.f32 %v857, %v1043
    %1045 = vmatmul.bf16.gmra.mxu0 %v833
    %v1046 = vpop.f32.mrf.mxu0
    %v1047 = vadd.f32 %v857, %v1046
    %v1048 = vpop.f32.mrf.mxu0
    %v1049 = vadd.f32 %v857, %v1048
    %1050 = vmatmul.bf16.gmra.mxu0 %v834
    %v1051 = vpop.f32.mrf.mxu0
    %v1052 = vadd.f32 %v857, %v1051
    %v1053 = vpop.f32.mrf.mxu0
    %v1054 = vadd.f32 %v857, %v1053
    %1055 = vmatmul.bf16.gmra.mxu0 %v835
    %v1056 = vpop.f32.mrf.mxu0
    %v1057 = vadd.f32 %v857, %v1056
    %v1058 = vpop.f32.mrf.mxu0
    %v1059 = vadd.f32 %v857, %v1058
    %1060 = vmatmul.bf16.gmra.mxu0 %v836
    %v1061 = vpop.f32.mrf.mxu0
    %v1062 = vadd.f32 %v857, %v1061
    %v1063 = vpop.f32.mrf.mxu0
    %v1064 = vadd.f32 %v857, %v1063
    %1065 = vmatmul.bf16.gmra.mxu0 %v837
    %v1066 = vpop.f32.mrf.mxu0
    %v1067 = vadd.f32 %v857, %v1066
    %v1068 = vpop.f32.mrf.mxu0
    %v1069 = vadd.f32 %v857, %v1068
    %1070 = vmatmul.bf16.gmra.mxu0 %v838
    %v1071 = vpop.f32.mrf.mxu0
    %v1072 = vadd.f32 %v857, %v1071
    %v1073 = vpop.f32.mrf.mxu0
    %v1074 = vadd.f32 %v857, %v1073
    %1075 = vdwg.mxu0
    %1076 = vst [vmem:[#allocation2] sm:$0xff] %v917
    %1077 = vst [vmem:[#allocation2 + $0x8] sm:$0xff] %v919
    %1078 = vst [vmem:[#allocation2 + $0x10] sm:$0xff] %v922
    %1079 = vst [vmem:[#allocation2 + $0x18] sm:$0xff] %v924
    %1080 = vst [vmem:[#allocation2 + $0x20] sm:$0xff] %v927
    %1081 = vst [vmem:[#allocation2 + $0x28] sm:$0xff] %v929
    %1082 = vst [vmem:[#allocation2 + $0x30] sm:$0xff] %v932
    %1083 = vst [vmem:[#allocation2 + $0x38] sm:$0xff] %v934
    %1084 = vst [vmem:[#allocation2 + $0x40] sm:$0xff] %v937
    %1085 = vst [vmem:[#allocation2 + $0x48] sm:$0xff] %v939
    %1086 = vst [vmem:[#allocation2 + $0x50] sm:$0xff] %v942
    %1087 = vst [vmem:[#allocation2 + $0x58] sm:$0xff] %v944
    %1088 = vst [vmem:[#allocation2 + $0x60] sm:$0xff] %v947
    %1089 = vst [vmem:[#allocation2 + $0x68] sm:$0xff] %v949
    %1090 = vst [vmem:[#allocation2 + $0x70] sm:$0xff] %v952
    %1091 = vst [vmem:[#allocation2 + $0x78] sm:$0xff] %v954
    %1092 = vst [vmem:[#allocation2 + $0x80] sm:$0xff] %v957
    %1093 = vst [vmem:[#allocation2 + $0x88] sm:$0xff] %v959
    %1094 = vst [vmem:[#allocation2 + $0x90] sm:$0xff] %v962
    %1095 = vst [vmem:[#allocation2 + $0x98] sm:$0xff] %v964
    %1096 = vst [vmem:[#allocation2 + $0xa0] sm:$0xff] %v967
    %1097 = vst [vmem:[#allocation2 + $0xa8] sm:$0xff] %v969
    %1098 = vst [vmem:[#allocation2 + $0xb0] sm:$0xff] %v972
    %1099 = vst [vmem:[#allocation2 + $0xb8] sm:$0xff] %v974
    %1100 = vst [vmem:[#allocation2 + $0xc0] sm:$0xff] %v977
    %1101 = vst [vmem:[#allocation2 + $0xc8] sm:$0xff] %v979
    %1102 = vst [vmem:[#allocation2 + $0xd0] sm:$0xff] %v982
    %1103 = vst [vmem:[#allocation2 + $0xd8] sm:$0xff] %v984
    %1104 = vst [vmem:[#allocation2 + $0xe0] sm:$0xff] %v987
    %1105 = vst [vmem:[#allocation2 + $0xe8] sm:$0xff] %v989
    %1106 = vst [vmem:[#allocation2 + $0xf0] sm:$0xff] %v992
    %1107 = vst [vmem:[#allocation2 + $0xf8] sm:$0xff] %v994
    %1108 = vst [vmem:[#allocation2 + $0x100] sm:$0xff] %v997
    %1109 = vst [vmem:[#allocation2 + $0x108] sm:$0xff] %v999
    %1110 = vst [vmem:[#allocation2 + $0x110] sm:$0xff] %v1002
    %1111 = vst [vmem:[#allocation2 + $0x118] sm:$0xff] %v1004
    %1112 = vst [vmem:[#allocation2 + $0x120] sm:$0xff] %v1007
    %1113 = vst [vmem:[#allocation2 + $0x128] sm:$0xff] %v1009
    %1114 = vst [vmem:[#allocation2 + $0x130] sm:$0xff] %v1012
    %1115 = vst [vmem:[#allocation2 + $0x138] sm:$0xff] %v1014
    %1116 = vst [vmem:[#allocation2 + $0x140] sm:$0xff] %v1017
    %1117 = vst [vmem:[#allocation2 + $0x148] sm:$0xff] %v1019
    %1118 = vst [vmem:[#allocation2 + $0x150] sm:$0xff] %v1022
    %1119 = vst [vmem:[#allocation2 + $0x158] sm:$0xff] %v1024
    %1120 = vst [vmem:[#allocation2 + $0x160] sm:$0xff] %v1027
    %1121 = vst [vmem:[#allocation2 + $0x168] sm:$0xff] %v1029
    %1122 = vst [vmem:[#allocation2 + $0x170] sm:$0xff] %v1032
    %1123 = vst [vmem:[#allocation2 + $0x178] sm:$0xff] %v1034
    %1124 = vst [vmem:[#allocation2 + $0x180] sm:$0xff] %v1037
    %1125 = vst [vmem:[#allocation2 + $0x188] sm:$0xff] %v1039
    %1126 = vst [vmem:[#allocation2 + $0x190] sm:$0xff] %v1042
    %1127 = vst [vmem:[#allocation2 + $0x198] sm:$0xff] %v1044
    %1128 = vst [vmem:[#allocation2 + $0x1a0] sm:$0xff] %v1047
    %1129 = vst [vmem:[#allocation2 + $0x1a8] sm:$0xff] %v1049
    %1130 = vst [vmem:[#allocation2 + $0x1b0] sm:$0xff] %v1052
    %1131 = vst [vmem:[#allocation2 + $0x1b8] sm:$0xff] %v1054
    %1132 = vst [vmem:[#allocation2 + $0x1c0] sm:$0xff] %v1057
    %1133 = vst [vmem:[#allocation2 + $0x1c8] sm:$0xff] %v1059
    %1134 = vst [vmem:[#allocation2 + $0x1d0] sm:$0xff] %v1062
    %1135 = vst [vmem:[#allocation2 + $0x1d8] sm:$0xff] %v1064
    %1136 = vst [vmem:[#allocation2 + $0x1e0] sm:$0xff] %v1067
    %1137 = vst [vmem:[#allocation2 + $0x1e8] sm:$0xff] %v1069
    %1138 = vst [vmem:[#allocation2 + $0x1f0] sm:$0xff] %v1072
    %1139 = vst [vmem:[#allocation2 + $0x1f8] sm:$0xff] %v1074
    // Predicated region
    $region30: #{tpu_custom_call.1} parent=1 // pred_check
      _
    $region31: #{tpu_custom_call.1} parent=1 // pred_check_branch
      %1141 = sbr.rel (0) target = $region33
    $region32: #{tpu_custom_call.1} parent=1 // pred_region
      %1143 = vsyncadd [#allocation3], 0
      %s1144 = sshll.u32 [#allocation2], 4
      %s1145 = int_to_ptr.vmem [resolvable:$true] %s1144
      %s1146 = sshll.u32 %s7, 4
      %s1147 = int_to_ptr.hbm [resolvable:$true] %s1146
      %1152 = dma.vmem_to_hbm [thread:$0]  %s1145, 8192, %s1147, [#allocation3], 128, 128, 8
    $region33: #{tpu_custom_call.1} parent=1 // pred_fallthru
      _
    // Predicated region
    $region34: #{tpu_custom_call.1} parent=1 // pred_check
      _
    $region35: #{tpu_custom_call.1} parent=1 // pred_check_branch
      %1154 = sbr.rel (0) target = $region37
    $region36: #{tpu_custom_call.1} parent=1 // pred_region
      %1156 = dma.done [#allocation3], 8192
    $region37: #{tpu_custom_call.1} parent=1 // pred_fallthru
      _
    %1157 = vsyncpa [#allocation3], 1

</llo_original>
